<compile_context>
chip_gen: v5e
topology: v5e:2x2
jax: 0.10.0
libtpu: 0.0.40
codegen_flags: <defaults>
</compile_context>

<pallas_src>
import functools

import jax
import jax.numpy as jnp
from jax.experimental import pallas as pl
from jax.experimental.pallas import tpu as pltpu


def _time_model_kernel(a_ref, omega_ref, phi_ref, bsum_ref, x_ref, o_ref, *, n_funcs):
    """Elementwise hot path: sum over n_funcs sine functions of the x tile.

    a/omega/phi/bsum are scalar-prefetched SMEM refs; x/o are VMEM tiles.
    """
    # Cast in the VPU: keeps HBM traffic at native input width for bf16/f16.
    x = x_ref[...].astype(jnp.float32)
    # Accumulator initialized with the first term plus the pre-summed bias.
    acc = a_ref[0] * jnp.sin(omega_ref[0] * x + phi_ref[0]) + bsum_ref[0]
    # n_funcs is a trace-time constant -> static unroll, scalar reads from SMEM.
    # TODO(synk): optionally evaluate the sine chain in bf16 on v6e/v7x
    # (2 elems/lane, ~2x VPU throughput) if precision allows; kernel is
    # VALU-bound, not memory-bound, so that is the only remaining big lever.
    for i in range(1, n_funcs):
        acc = acc + a_ref[i] * jnp.sin(omega_ref[i] * x + phi_ref[i])
    o_ref[...] = acc.astype(o_ref.dtype)


def _round_up(n, m):
    return ((n + m - 1) // m) * m


def time_model_forward(x, A, omega, phi, B, *, max_tile_rows=512):
    """Applies the TimeModel forward to x of any shape.

    Computes in float32, returns the input dtype.
    """
    n_funcs = int(A.shape[0])
    orig_shape = x.shape
    out_dtype = x.dtype
    total = int(x.size)

    if n_funcs == 0 or total == 0:
        # Zero SineModules -> PyTorch forward returns 0 (broadcast to x here).
        return jnp.zeros(orig_shape, dtype=out_dtype)

    A = A.reshape(-1).astype(jnp.float32)
    omega = omega.reshape(-1).astype(jnp.float32)
    phi = phi.reshape(-1).astype(jnp.float32)
    # Bias is shape-independent: fold sum_i B_i into a single SMEM scalar.
    b_total = jnp.sum(B.astype(jnp.float32)).reshape(1)

    # Adaptive lane width: widest multiple of 128 dividing x.size -> the
    # flatten/reshape below is a free bitcast (no padding HBM pass).
    lane_dim = None
    for cand in (1024, 512, 256, 128):
        if total % cand == 0:
            lane_dim = cand
            break

    xf = x.reshape(-1)
    padded = lane_dim is None
    if padded:
        # Last-resort fallback: pad to a lane-dense width (one extra HBM pass).
        lane_dim = 1024
        padded_total = _round_up(total, lane_dim)
        xf = jnp.pad(xf, (0, padded_total - total))
    else:
        padded_total = total

    rows = padded_total // lane_dim
    x2d = xf.reshape(rows, lane_dim)

    # Tile rows: multiple of 8 (sublane), <= max_tile_rows (2 MiB f32 tiles),
    # and >= 2 grid steps when possible so both v7x TensorCores get work.
    if rows <= 8:
        tile_rows = rows  # block row dim == full array dim (allowed)
    else:
        tile_rows = min(max_tile_rows, _round_up(pl.cdiv(rows, 2), 8))
    grid = (pl.cdiv(rows, tile_rows),)  # partial last block handled by Pallas

    kernel = functools.partial(_time_model_kernel, n_funcs=n_funcs)

    itemsize = jnp.dtype(out_dtype).itemsize
    cost = pl.CostEstimate(
        # ~4 flops per func per elem outside sin + ~11 for the sin polynomial.
        flops=15 * n_funcs * total,
        transcendentals=n_funcs * total,
        bytes_accessed=2 * itemsize * total,
    )

    out2d = pl.pallas_call(
        kernel,
        out_shape=jax.ShapeDtypeStruct((rows, lane_dim), out_dtype),
        grid_spec=pltpu.PrefetchScalarGridSpec(
            num_scalar_prefetch=4,  # A, omega, phi, b_total -> SMEM
            grid=grid,
            in_specs=[
                pl.BlockSpec((tile_rows, lane_dim), lambda i, *_: (i, 0)),
            ],
            out_specs=pl.BlockSpec((tile_rows, lane_dim), lambda i, *_: (i, 0)),
        ),
        compiler_params=pltpu.CompilerParams(
            dimension_semantics=("parallel",),
            vmem_limit_bytes=32 * 1024 * 1024,
        ),
        cost_estimate=cost,
    )(A, omega, phi, b_total, x2d)

    if padded:
        return out2d.reshape(-1)[:total].reshape(orig_shape)
    return out2d.reshape(orig_shape)


def reference_forward(x, A, omega, phi, B):
    """Pure-JAX reference matching the PyTorch TimeModel forward."""
    result = jnp.zeros_like(x, dtype=jnp.float32)
    for i in range(A.shape[0]):
        result = result + (A[i] * jnp.sin(omega[i] * x + phi[i]) + B[i])
    return result.astype(x.dtype)


if __name__ == "__main__":
    key = jax.random.PRNGKey(0)
    kx, ka, kw, kp, kb = jax.random.split(key, 5)

    # Module config: TimeModel with 4 SineModules (scalar params ~ U(0,1) each).
    N_FUNCS = 4
    A = jax.random.uniform(ka, (N_FUNCS,), dtype=jnp.float32)
    omega = jax.random.uniform(kw, (N_FUNCS,), dtype=jnp.float32)
    phi = jax.random.uniform(kp, (N_FUNCS,), dtype=jnp.float32)
    B = jax.random.uniform(kb, (N_FUNCS,), dtype=jnp.float32)

    # Input: NCHW, small shape.
    x = jax.random.normal(kx, (2, 4, 16, 16), dtype=jnp.float32)

    out = time_model_forward(x, A, omega, phi, B)
    out = jax.block_until_ready(out)

    ref = reference_forward(x, A, omega, phi, B)
    assert out.shape == x.shape
    assert out.dtype == x.dtype
    assert jnp.allclose(out, ref, atol=1e-5, rtol=1e-5), "mismatch vs reference"

    print("KERNEL_OK")
</pallas_src>

<mosaic_0001>
module attributes {stable_mosaic.version = 11 : i64} {
  func.func @_time_model_kernel(%arg0: i32, %arg1: memref<4xf32, #tpu.memory_space<smem>>, %arg2: memref<4xf32, #tpu.memory_space<smem>>, %arg3: memref<4xf32, #tpu.memory_space<smem>>, %arg4: memref<1xf32, #tpu.memory_space<smem>>, %arg5: memref<2x1024xf32, #tpu.memory_space<vmem>>, %arg6: memref<2x1024xf32, #tpu.memory_space<vmem>>) attributes {dimension_semantics = [#tpu.dimension_semantics<parallel>], iteration_bounds = array<i64: 1>, scalar_prefetch = 4 : i64, scratch_operands = 0 : i64, tpu.core_type = #tpu.core_type<tc>, window_params = [{transform_indices = @transform_0, window_bounds = array<i64: 2, 1024>}, {transform_indices = @transform_1, window_bounds = array<i64: 2, 1024>}]} {
    %c0 = arith.constant 0 : index
    %c0_0 = arith.constant 0 : index
    %0 = vector.load %arg5[%c0, %c0_0] : memref<2x1024xf32, #tpu.memory_space<vmem>>, vector<2x1024xf32>
    %c0_1 = arith.constant 0 : index
    %1 = memref.load %arg1[%c0_1] : memref<4xf32, #tpu.memory_space<smem>>
    %c0_2 = arith.constant 0 : index
    %2 = memref.load %arg2[%c0_2] : memref<4xf32, #tpu.memory_space<smem>>
    %3 = vector.broadcast %2 : f32 to vector<2x1024xf32>
    %4 = arith.mulf %3, %0 : vector<2x1024xf32>
    %c0_3 = arith.constant 0 : index
    %5 = memref.load %arg3[%c0_3] : memref<4xf32, #tpu.memory_space<smem>>
    %6 = vector.broadcast %5 : f32 to vector<2x1024xf32>
    %7 = arith.addf %4, %6 : vector<2x1024xf32>
    %8 = math.sin %7 : vector<2x1024xf32>
    %9 = vector.broadcast %1 : f32 to vector<2x1024xf32>
    %10 = arith.mulf %9, %8 : vector<2x1024xf32>
    %c0_4 = arith.constant 0 : index
    %11 = memref.load %arg4[%c0_4] : memref<1xf32, #tpu.memory_space<smem>>
    %12 = vector.broadcast %11 : f32 to vector<2x1024xf32>
    %13 = arith.addf %10, %12 : vector<2x1024xf32>
    %c1 = arith.constant 1 : index
    %14 = memref.load %arg1[%c1] : memref<4xf32, #tpu.memory_space<smem>>
    %c1_5 = arith.constant 1 : index
    %15 = memref.load %arg2[%c1_5] : memref<4xf32, #tpu.memory_space<smem>>
    %16 = vector.broadcast %15 : f32 to vector<2x1024xf32>
    %17 = arith.mulf %16, %0 : vector<2x1024xf32>
    %c1_6 = arith.constant 1 : index
    %18 = memref.load %arg3[%c1_6] : memref<4xf32, #tpu.memory_space<smem>>
    %19 = vector.broadcast %18 : f32 to vector<2x1024xf32>
    %20 = arith.addf %17, %19 : vector<2x1024xf32>
    %21 = math.sin %20 : vector<2x1024xf32>
    %22 = vector.broadcast %14 : f32 to vector<2x1024xf32>
    %23 = arith.mulf %22, %21 : vector<2x1024xf32>
    %24 = arith.addf %13, %23 : vector<2x1024xf32>
    %c2 = arith.constant 2 : index
    %25 = memref.load %arg1[%c2] : memref<4xf32, #tpu.memory_space<smem>>
    %c2_7 = arith.constant 2 : index
    %26 = memref.load %arg2[%c2_7] : memref<4xf32, #tpu.memory_space<smem>>
    %27 = vector.broadcast %26 : f32 to vector<2x1024xf32>
    %28 = arith.mulf %27, %0 : vector<2x1024xf32>
    %c2_8 = arith.constant 2 : index
    %29 = memref.load %arg3[%c2_8] : memref<4xf32, #tpu.memory_space<smem>>
    %30 = vector.broadcast %29 : f32 to vector<2x1024xf32>
    %31 = arith.addf %28, %30 : vector<2x1024xf32>
    %32 = math.sin %31 : vector<2x1024xf32>
    %33 = vector.broadcast %25 : f32 to vector<2x1024xf32>
    %34 = arith.mulf %33, %32 : vector<2x1024xf32>
    %35 = arith.addf %24, %34 : vector<2x1024xf32>
    %c3 = arith.constant 3 : index
    %36 = memref.load %arg1[%c3] : memref<4xf32, #tpu.memory_space<smem>>
    %c3_9 = arith.constant 3 : index
    %37 = memref.load %arg2[%c3_9] : memref<4xf32, #tpu.memory_space<smem>>
    %38 = vector.broadcast %37 : f32 to vector<2x1024xf32>
    %39 = arith.mulf %38, %0 : vector<2x1024xf32>
    %c3_10 = arith.constant 3 : index
    %40 = memref.load %arg3[%c3_10] : memref<4xf32, #tpu.memory_space<smem>>
    %41 = vector.broadcast %40 : f32 to vector<2x1024xf32>
    %42 = arith.addf %39, %41 : vector<2x1024xf32>
    %43 = math.sin %42 : vector<2x1024xf32>
    %44 = vector.broadcast %36 : f32 to vector<2x1024xf32>
    %45 = arith.mulf %44, %43 : vector<2x1024xf32>
    %46 = arith.addf %35, %45 : vector<2x1024xf32>
    %c0_11 = arith.constant 0 : index
    %c0_12 = arith.constant 0 : index
    %47 = vector.load %arg6[%c0_11, %c0_12] : memref<2x1024xf32, #tpu.memory_space<vmem>>, vector<2x1024xf32>
    tpu.vector_store %arg6[%c0_11, %c0_12], %46 {strides = array<i32>} : memref<2x1024xf32, #tpu.memory_space<vmem>>, vector<2x1024xf32>,
    return
  }
  func.func @transform_0(%arg0: i32, %arg1: memref<4xf32, #tpu.memory_space<smem>>, %arg2: memref<4xf32, #tpu.memory_space<smem>>, %arg3: memref<4xf32, #tpu.memory_space<smem>>, %arg4: memref<1xf32, #tpu.memory_space<smem>>) -> (i32, i32) {
    %c0_i32 = arith.constant 0 : i32
    %c0_i32_0 = arith.constant 0 : i32
    return %arg0, %c0_i32 : i32, i32
  }
  func.func @transform_1(%arg0: i32, %arg1: memref<4xf32, #tpu.memory_space<smem>>, %arg2: memref<4xf32, #tpu.memory_space<smem>>, %arg3: memref<4xf32, #tpu.memory_space<smem>>, %arg4: memref<1xf32, #tpu.memory_space<smem>>) -> (i32, i32) {
    %c0_i32 = arith.constant 0 : i32
    %c0_i32_0 = arith.constant 0 : i32
    return %arg0, %c0_i32 : i32, i32
  }
}

</mosaic_0001>

<llo_original>
// kernel: tpu_custom_call.1
$region0: #{tpu_custom_call.1}
  #allocation0 [shape = 'u32[]', space=smem, size = 0x4, offset = 0x4, fixed_abs, tag = 'smem constant byte address 0x4 - core index']
  #allocation1 [shape = 'u32[72,128]{1,0:T(1,128)}', space=vmem, size = 0x9000, scoped, tag = 'internal scratch']
  #allocation2 [shape = 's32[1]{0}', space=sflag, size = 0x4, scoped, tag = 'scoped memory for tpu_custom_call.1']
  #allocation3 [shape = 'u8[512]{0}', space=smem, size = 0x200, scoped, tag = 'prefetched SMEM operand 0']
  #allocation4 [shape = 'u8[512]{0}', space=smem, size = 0x200, scoped, tag = 'prefetched SMEM operand 1']
  #allocation5 [shape = 'u8[512]{0}', space=smem, size = 0x200, scoped, tag = 'prefetched SMEM operand 2']
  #allocation6 [shape = 'f32[1]{0:T(128)S(6)}', space=smem, size = 0x200, scoped, tag = 'prefetched SMEM operand 3']
  %s0 = inlined_call_operand.vmem [shape: f32[4], index: 0, kind: input, shape index: {}]
  %s1 = inlined_call_operand.vmem [shape: f32[4], index: 1, kind: input, shape index: {}]
  %s2 = inlined_call_operand.vmem [shape: f32[4], index: 2, kind: input, shape index: {}]
  %s3 = inlined_call_operand.<no memory space> [shape: f32[1], index: 3, kind: input, shape index: {}]
  %s4 = inlined_call_operand.hbm [shape: f32[2,1024], index: 4, kind: input, shape index: {}]
  %s5 = inlined_call_operand.hbm [shape: f32[2,1024], index: 5, kind: output, shape index: {}]
  %s6 = sld [smem:[#allocation0]]
  $region18: #{tpu_custom_call.1} parent=0
    _
  %s8 = ssub.s32 1, %s6
  %s9 = scalar_select 0, %s8, %s6
  %s11 = sshll.u32 %s0, 4
  %s12 = int_to_ptr.vmem [resolvable:$true] %s11
  %14 = dma.vmem_to_smem %s12, 16, [#allocation3], [#allocation2]
  %s16 = sshll.u32 %s1, 4
  %s17 = int_to_ptr.vmem [resolvable:$true] %s16
  %19 = dma.vmem_to_smem %s17, 16, [#allocation4], [#allocation2]
  %s21 = sshll.u32 %s2, 4
  %s22 = int_to_ptr.vmem [resolvable:$true] %s21
  %24 = dma.vmem_to_smem %s22, 16, [#allocation5], [#allocation2]
  %25 = sst [smem:[#allocation6]] %s3
  %27 = dma.done [#allocation2], 48
  %28 = sfence
  $region1: #{tpu_custom_call.1} parent=0
    #allocation7 [shape = 'u8[8192]{0}', space=vmem, size = 0x2000, scoped, tag = 'input window, operand 4, single buffered']
    #allocation8 [shape = 's32[1]{0}', space=sflag, size = 0x4, scoped, tag = 'scoped memory for tpu_custom_call.1']
    #allocation9 [shape = 's32[1]{0}', space=sflag, size = 0x4, scoped, tag = 'scoped memory for tpu_custom_call.1']
    #allocation10 [shape = 'u8[8192]{0}', space=vmem, size = 0x2000, scoped, tag = 'output window, operand 0, single buffered']
    %29 = vsyncpa [#allocation8], 0
    %30 = vsyncpa [#allocation9], 0
    // Predicated region
    $region2: #{tpu_custom_call.1} parent=1 // pred_check
      _
    $region3: #{tpu_custom_call.1} parent=1 // pred_check_branch
      %32 = sbr.rel (0) target = $region5
    $region4: #{tpu_custom_call.1} parent=1 // pred_region
      %34 = vsyncadd [#allocation8], 0
      %s36 = sshll.u32 %s4, 4
      %s37 = int_to_ptr.hbm [resolvable:$true] %s36
      %s38 = sshll.u32 [#allocation7], 4
      %s39 = int_to_ptr.vmem [resolvable:$true] %s38
      %41 = dma.hbm_to_vmem [thread:$0]  %s37, 256, %s39, [#allocation8]
    $region5: #{tpu_custom_call.1} parent=1 // pred_fallthru
      _
    // Predicated region
    $region6: #{tpu_custom_call.1} parent=1 // pred_check
      _
    $region7: #{tpu_custom_call.1} parent=1 // pred_check_branch
      %43 = sbr.rel (0) target = $region9
    $region8: #{tpu_custom_call.1} parent=1 // pred_region
      %45 = dma.done [#allocation8], 256
    $region9: #{tpu_custom_call.1} parent=1 // pred_fallthru
      _
    %v46 = vld [vmem:[#allocation7] sm:$0xff]
    %v47 = vld [vmem:[#allocation7 + $0x8] sm:$0xff]
    %s48 = sld [smem:[#allocation3]]
    %s49 = sld [smem:[#allocation4]]
    %v50 = vstv %s49
    %v51 = vmul.f32 %v50, %v46
    %v52 = vmul.f32 %v50, %v47
    %s53 = sld [smem:[#allocation5]]
    %v54 = vstv %s53
    %v55 = vadd.f32 %v51, %v54
    %v56 = vadd.f32 %v52, %v54
    %v57 = vand.u32 2147483647, %v55
    %vm58 = vcmp.le.f32.partialorder %v57, 0.7853982
    %vm59 = vcmp.lt.s32.totalorder %v55, 0
    %v60 = vand.u32 %v55, 2139095040
    %v61 = vshrl.u32 %v60, 23
    %v62 = vsub.s32 %v61, 127
    %v63 = vand.u32 2147483647, %v55
    %v64 = vand.u32 %v63, 8388607
    %v65 = vor.u32 %v64, 8388608
    %v66 = vsub.s32 0, %v65
    %v67 = vadd.s32 %v62, 1
    %vm68 = vcmp.gt.s32.totalorder %v67, 0
    %v69 = vsel %vm68, %v67, 0
    %v70 = vshrl.u32 %v69, 5
    %v71 = vand.u32 %v69, 31
    %v72 = vsub.s32 32, %v71
    %v73 = vshrl.u32 683565275, %v72
    %v74 = vshll.u32 683565275, %v71
    %v75 = vshrl.u32 2475754826, %v72
    %v76 = vor.u32 %v74, %v75
    %v77 = vshll.u32 2475754826, %v71
    %v78 = vshrl.u32 2131351028, %v72
    %v79 = vor.u32 %v77, %v78
    %v80 = vshll.u32 2131351028, %v71
    %v81 = vshrl.u32 2102212464, %v72
    %v82 = vor.u32 %v80, %v81
    %v83 = vshll.u32 2102212464, %v71
    %v84 = vshrl.u32 920167782, %v72
    %v85 = vor.u32 %v83, %v84
    %v86 = vshll.u32 920167782, %v71
    %v87 = vshrl.u32 1326507024, %v72
    %v88 = vor.u32 %v86, %v87
    %vm89 = vcmp.lt.s32.totalorder %v70, 1
    %vm90 = vcmp.lt.s32.totalorder %v70, 2
    %vm91 = vcmp.lt.s32.totalorder %v70, 3
    %vm92 = vcmp.lt.s32.totalorder %v70, 4
    %v93 = vsel %vm89, %v73, %v76
    %v94 = vsel %vm92, %v82, 2102212464
    %v95 = vsel %vm91, %v79, %v94
    %v96 = vsel %vm90, %v93, %v95
    %v97 = vsel %vm89, %v76, %v79
    %v98 = vsel %vm92, %v85, 920167782
    %v99 = vsel %vm91, %v82, %v98
    %v100 = vsel %vm90, %v97, %v99
    %v101 = vsel %vm89, %v79, %v82
    %v102 = vsel %vm92, %v88, 1326507024
    %v103 = vsel %vm91, %v85, %v102
    %v104 = vsel %vm90, %v101, %v103
    %v105 = vshll.u32 %v65, 8
    %v106 = vand.u32 %v105, 65535
    %v107 = vshrl.u32 %v105, 16
    %v108 = vand.u32 %v104, 65535
    %v109 = vshrl.u32 %v104, 16
    %v110 = vmul.u32 %v106, %v108
    %v111 = vmul.u32 %v106, %v109
    %v112 = vmul.u32 %v107, %v108
    %v113 = vmul.u32 %v107, %v109
    %v114 = vshll.u32 %v111, 16
    %v115 = vshrl.u32 %v111, 16
    %v116 = vshll.u32 %v112, 16
    %v117 = vshrl.u32 %v112, 16
    %vm118 = vc.u32 %v110, %v114
    %v119 = vsel %vm118, 1, 0
    %v120 = vadd.s32 %v110, %v114
    %v121 = vadd.s32 %v113, %v119
    %vm122 = vc.u32 %v120, %v116
    %v123 = vsel %vm122, 1, 0
    %v124 = vadd.s32 %v120, %v116
    %v125 = vadd.s32 %v121, %v123
    %v126 = vadd.s32 %v125, %v115
    %v127 = vadd.s32 %v126, %v117
    %v128 = vand.u32 %v105, 65535
    %v129 = vshrl.u32 %v105, 16
    %v130 = vand.u32 %v100, 65535
    %v131 = vshrl.u32 %v100, 16
    %v132 = vmul.u32 %v128, %v130
    %v133 = vmul.u32 %v128, %v131
    %v134 = vmul.u32 %v129, %v130
    %v135 = vmul.u32 %v129, %v131
    %v136 = vshll.u32 %v133, 16
    %v137 = vshrl.u32 %v133, 16
    %v138 = vshll.u32 %v134, 16
    %v139 = vshrl.u32 %v134, 16
    %vm140 = vc.u32 %v132, %v136
    %v141 = vsel %vm140, 1, 0
    %v142 = vadd.s32 %v132, %v136
    %v143 = vadd.s32 %v135, %v141
    %vm144 = vc.u32 %v142, %v138
    %v145 = vsel %vm144, 1, 0
    %v146 = vadd.s32 %v142, %v138
    %v147 = vadd.s32 %v143, %v145
    %v148 = vadd.s32 %v147, %v137
    %v149 = vadd.s32 %v148, %v139
    %v150 = vmul.u32 %v105, %v96
    %v151 = vadd.s32 %v127, %v146
    %vm152 = vc.u32 %v127, %v146
    %v153 = vadd.s32 %v149, 1
    %v154 = vsel %vm152, %v153, %v149
    %v155 = vadd.s32 %v150, %v154
    %v156 = vadd.s32 %v155, 536870912
    %v157 = vshrl.u32 %v156, 30
    %v158 = vshll.u32 %v157, 30
    %v159 = vsub.s32 %v155, %v158
    %vm160 = vcmp.lt.s32.totalorder %v159, 0
    %v161 = vsub.s32 0, %v159
    %v162 = vsel %vm160, %v161, %v159
    %v163 = vclz %v162
    %v164 = vsub.s32 %v163, 2
    %vm165 = vcmp.gt.s32.totalorder 0, %v164
    %v166 = vsel %vm165, 0, %v164
    %v167 = vsub.s32 32, %v166
    %v168 = vshll.u32 %v159, %v166
    %v169 = vshrl.u32 %v151, %v167
    %v170 = vor.u32 %v168, %v169
    %v171 = vsub.s32 4294967266, %v166
    %v172 = vadd.s32 %v171, 127
    %v173 = vshll.u32 %v172, 23
    %v174 = vor.u32 4788187, %v173
    %v175 = vand.u32 2147483647, %v174
    %v177 = vcvt.s32.f32 %v170
    %v178 = vmul.f32 %v177, %v175
    %v179 = vxor.u32 %v178, 2147483648
    %v180 = vsel %vm59, %v179, %v178
    %v181 = vsub.s32 4, %v157
    %v182 = vsel %vm59, %v181, %v157
    %v183 = vsel %vm58, %v55, %v180
    %v184 = vsel %vm58, 0, %v182
    %v185 = vmul.f32 %v183, %v183
    %v186 = vmul.f32 %v185, -0.001358992
    %v187 = vadd.f32 %v186, 0.041655596
    %v188 = vmul.f32 %v185, %v187
    %v189 = vadd.f32 %v188, -0.4999988
    %v190 = vmul.f32 %v185, %v189
    %v191 = vadd.f32 1.0, %v190
    %v192 = vmul.f32 %v183, %v183
    %v193 = vmul.f32 %v192, -0.00019511016
    %v194 = vadd.f32 %v193, 0.008332121
    %v195 = vmul.f32 %v192, %v194
    %v196 = vadd.f32 %v195, -0.16666654
    %v197 = vmul.f32 %v192, %v196
    %v198 = vadd.f32 %v197, 1.0
    %v199 = vmul.f32 %v198, %v183
    %vm200 = vweird.f32 %v55
    %v201 = vadd.s32 %v184, 3
    %v202 = vand.u32 %v201, 3
    %vm203 = vcmp.lt.s32.totalorder %v202, 2
    %vm204 = vcmp.eq.s32.totalorder %v202, 0
    %v205 = vxor.u32 %v199, 2147483648
    %v206 = vsel %vm204, %v191, %v205
    %vm207 = vcmp.eq.s32.totalorder %v202, 2
    %v208 = vxor.u32 %v191, 2147483648
    %v209 = vsel %vm207, %v208, %v199
    %v210 = vsel %vm203, %v206, %v209
    %v211 = vsel %vm200, nan, %v210
    %v212 = vand.u32 2147483647, %v56
    %vm213 = vcmp.le.f32.partialorder %v212, 0.7853982
    %vm214 = vcmp.lt.s32.totalorder %v56, 0
    %v215 = vand.u32 %v56, 2139095040
    %v216 = vshrl.u32 %v215, 23
    %v217 = vsub.s32 %v216, 127
    %v218 = vand.u32 2147483647, %v56
    %v219 = vand.u32 %v218, 8388607
    %v220 = vor.u32 %v219, 8388608
    %v221 = vsub.s32 0, %v220
    %v222 = vadd.s32 %v217, 1
    %vm223 = vcmp.gt.s32.totalorder %v222, 0
    %v224 = vsel %vm223, %v222, 0
    %v225 = vshrl.u32 %v224, 5
    %v226 = vand.u32 %v224, 31
    %v227 = vsub.s32 32, %v226
    %v228 = vshrl.u32 683565275, %v227
    %v229 = vshll.u32 683565275, %v226
    %v230 = vshrl.u32 2475754826, %v227
    %v231 = vor.u32 %v229, %v230
    %v232 = vshll.u32 2475754826, %v226
    %v233 = vshrl.u32 2131351028, %v227
    %v234 = vor.u32 %v232, %v233
    %v235 = vshll.u32 2131351028, %v226
    %v236 = vshrl.u32 2102212464, %v227
    %v237 = vor.u32 %v235, %v236
    %v238 = vshll.u32 2102212464, %v226
    %v239 = vshrl.u32 920167782, %v227
    %v240 = vor.u32 %v238, %v239
    %v241 = vshll.u32 920167782, %v226
    %v242 = vshrl.u32 1326507024, %v227
    %v243 = vor.u32 %v241, %v242
    %vm244 = vcmp.lt.s32.totalorder %v225, 1
    %vm245 = vcmp.lt.s32.totalorder %v225, 2
    %vm246 = vcmp.lt.s32.totalorder %v225, 3
    %vm247 = vcmp.lt.s32.totalorder %v225, 4
    %v248 = vsel %vm244, %v228, %v231
    %v249 = vsel %vm247, %v237, 2102212464
    %v250 = vsel %vm246, %v234, %v249
    %v251 = vsel %vm245, %v248, %v250
    %v252 = vsel %vm244, %v231, %v234
    %v253 = vsel %vm247, %v240, 920167782
    %v254 = vsel %vm246, %v237, %v253
    %v255 = vsel %vm245, %v252, %v254
    %v256 = vsel %vm244, %v234, %v237
    %v257 = vsel %vm247, %v243, 1326507024
    %v258 = vsel %vm246, %v240, %v257
    %v259 = vsel %vm245, %v256, %v258
    %v260 = vshll.u32 %v220, 8
    %v261 = vand.u32 %v260, 65535
    %v262 = vshrl.u32 %v260, 16
    %v263 = vand.u32 %v259, 65535
    %v264 = vshrl.u32 %v259, 16
    %v265 = vmul.u32 %v261, %v263
    %v266 = vmul.u32 %v261, %v264
    %v267 = vmul.u32 %v262, %v263
    %v268 = vmul.u32 %v262, %v264
    %v269 = vshll.u32 %v266, 16
    %v270 = vshrl.u32 %v266, 16
    %v271 = vshll.u32 %v267, 16
    %v272 = vshrl.u32 %v267, 16
    %vm273 = vc.u32 %v265, %v269
    %v274 = vsel %vm273, 1, 0
    %v275 = vadd.s32 %v265, %v269
    %v276 = vadd.s32 %v268, %v274
    %vm277 = vc.u32 %v275, %v271
    %v278 = vsel %vm277, 1, 0
    %v279 = vadd.s32 %v275, %v271
    %v280 = vadd.s32 %v276, %v278
    %v281 = vadd.s32 %v280, %v270
    %v282 = vadd.s32 %v281, %v272
    %v283 = vand.u32 %v260, 65535
    %v284 = vshrl.u32 %v260, 16
    %v285 = vand.u32 %v255, 65535
    %v286 = vshrl.u32 %v255, 16
    %v287 = vmul.u32 %v283, %v285
    %v288 = vmul.u32 %v283, %v286
    %v289 = vmul.u32 %v284, %v285
    %v290 = vmul.u32 %v284, %v286
    %v291 = vshll.u32 %v288, 16
    %v292 = vshrl.u32 %v288, 16
    %v293 = vshll.u32 %v289, 16
    %v294 = vshrl.u32 %v289, 16
    %vm295 = vc.u32 %v287, %v291
    %v296 = vsel %vm295, 1, 0
    %v297 = vadd.s32 %v287, %v291
    %v298 = vadd.s32 %v290, %v296
    %vm299 = vc.u32 %v297, %v293
    %v300 = vsel %vm299, 1, 0
    %v301 = vadd.s32 %v297, %v293
    %v302 = vadd.s32 %v298, %v300
    %v303 = vadd.s32 %v302, %v292
    %v304 = vadd.s32 %v303, %v294
    %v305 = vmul.u32 %v260, %v251
    %v306 = vadd.s32 %v282, %v301
    %vm307 = vc.u32 %v282, %v301
    %v308 = vadd.s32 %v304, 1
    %v309 = vsel %vm307, %v308, %v304
    %v310 = vadd.s32 %v305, %v309
    %v311 = vadd.s32 %v310, 536870912
    %v312 = vshrl.u32 %v311, 30
    %v313 = vshll.u32 %v312, 30
    %v314 = vsub.s32 %v310, %v313
    %vm315 = vcmp.lt.s32.totalorder %v314, 0
    %v316 = vsub.s32 0, %v314
    %v317 = vsel %vm315, %v316, %v314
    %v318 = vclz %v317
    %v319 = vsub.s32 %v318, 2
    %vm320 = vcmp.gt.s32.totalorder 0, %v319
    %v321 = vsel %vm320, 0, %v319
    %v322 = vsub.s32 32, %v321
    %v323 = vshll.u32 %v314, %v321
    %v324 = vshrl.u32 %v306, %v322
    %v325 = vor.u32 %v323, %v324
    %v326 = vsub.s32 4294967266, %v321
    %v327 = vadd.s32 %v326, 127
    %v328 = vshll.u32 %v327, 23
    %v329 = vor.u32 4788187, %v328
    %v330 = vand.u32 2147483647, %v329
    %v332 = vcvt.s32.f32 %v325
    %v333 = vmul.f32 %v332, %v330
    %v334 = vxor.u32 %v333, 2147483648
    %v335 = vsel %vm214, %v334, %v333
    %v336 = vsub.s32 4, %v312
    %v337 = vsel %vm214, %v336, %v312
    %v338 = vsel %vm213, %v56, %v335
    %v339 = vsel %vm213, 0, %v337
    %v340 = vmul.f32 %v338, %v338
    %v341 = vmul.f32 %v340, -0.001358992
    %v342 = vadd.f32 %v341, 0.041655596
    %v343 = vmul.f32 %v340, %v342
    %v344 = vadd.f32 %v343, -0.4999988
    %v345 = vmul.f32 %v340, %v344
    %v346 = vadd.f32 1.0, %v345
    %v347 = vmul.f32 %v338, %v338
    %v348 = vmul.f32 %v347, -0.00019511016
    %v349 = vadd.f32 %v348, 0.008332121
    %v350 = vmul.f32 %v347, %v349
    %v351 = vadd.f32 %v350, -0.16666654
    %v352 = vmul.f32 %v347, %v351
    %v353 = vadd.f32 %v352, 1.0
    %v354 = vmul.f32 %v353, %v338
    %vm355 = vweird.f32 %v56
    %v356 = vadd.s32 %v339, 3
    %v357 = vand.u32 %v356, 3
    %vm358 = vcmp.lt.s32.totalorder %v357, 2
    %vm359 = vcmp.eq.s32.totalorder %v357, 0
    %v360 = vxor.u32 %v354, 2147483648
    %v361 = vsel %vm359, %v346, %v360
    %vm362 = vcmp.eq.s32.totalorder %v357, 2
    %v363 = vxor.u32 %v346, 2147483648
    %v364 = vsel %vm362, %v363, %v354
    %v365 = vsel %vm358, %v361, %v364
    %v366 = vsel %vm355, nan, %v365
    %v367 = vstv %s48
    %v368 = vmul.f32 %v367, %v211
    %v369 = vmul.f32 %v367, %v366
    %s370 = sld [smem:[#allocation6]]
    %v371 = vstv %s370
    %v372 = vadd.f32 %v368, %v371
    %v373 = vadd.f32 %v369, %v371
    %s374 = sld [smem:[#allocation3 + $0x1]]
    %s375 = sld [smem:[#allocation4 + $0x1]]
    %v376 = vstv %s375
    %v377 = vmul.f32 %v376, %v46
    %v378 = vmul.f32 %v376, %v47
    %s379 = sld [smem:[#allocation5 + $0x1]]
    %v380 = vstv %s379
    %v381 = vadd.f32 %v377, %v380
    %v382 = vadd.f32 %v378, %v380
    %v383 = vand.u32 2147483647, %v381
    %vm384 = vcmp.le.f32.partialorder %v383, 0.7853982
    %vm385 = vcmp.lt.s32.totalorder %v381, 0
    %v386 = vand.u32 %v381, 2139095040
    %v387 = vshrl.u32 %v386, 23
    %v388 = vsub.s32 %v387, 127
    %v389 = vand.u32 2147483647, %v381
    %v390 = vand.u32 %v389, 8388607
    %v391 = vor.u32 %v390, 8388608
    %v392 = vsub.s32 0, %v391
    %v393 = vadd.s32 %v388, 1
    %vm394 = vcmp.gt.s32.totalorder %v393, 0
    %v395 = vsel %vm394, %v393, 0
    %v396 = vshrl.u32 %v395, 5
    %v397 = vand.u32 %v395, 31
    %v398 = vsub.s32 32, %v397
    %v399 = vshrl.u32 683565275, %v398
    %v400 = vshll.u32 683565275, %v397
    %v401 = vshrl.u32 2475754826, %v398
    %v402 = vor.u32 %v400, %v401
    %v403 = vshll.u32 2475754826, %v397
    %v404 = vshrl.u32 2131351028, %v398
    %v405 = vor.u32 %v403, %v404
    %v406 = vshll.u32 2131351028, %v397
    %v407 = vshrl.u32 2102212464, %v398
    %v408 = vor.u32 %v406, %v407
    %v409 = vshll.u32 2102212464, %v397
    %v410 = vshrl.u32 920167782, %v398
    %v411 = vor.u32 %v409, %v410
    %v412 = vshll.u32 920167782, %v397
    %v413 = vshrl.u32 1326507024, %v398
    %v414 = vor.u32 %v412, %v413
    %vm415 = vcmp.lt.s32.totalorder %v396, 1
    %vm416 = vcmp.lt.s32.totalorder %v396, 2
    %vm417 = vcmp.lt.s32.totalorder %v396, 3
    %vm418 = vcmp.lt.s32.totalorder %v396, 4
    %v419 = vsel %vm415, %v399, %v402
    %v420 = vsel %vm418, %v408, 2102212464
    %v421 = vsel %vm417, %v405, %v420
    %v422 = vsel %vm416, %v419, %v421
    %v423 = vsel %vm415, %v402, %v405
    %v424 = vsel %vm418, %v411, 920167782
    %v425 = vsel %vm417, %v408, %v424
    %v426 = vsel %vm416, %v423, %v425
    %v427 = vsel %vm415, %v405, %v408
    %v428 = vsel %vm418, %v414, 1326507024
    %v429 = vsel %vm417, %v411, %v428
    %v430 = vsel %vm416, %v427, %v429
    %v431 = vshll.u32 %v391, 8
    %v432 = vand.u32 %v431, 65535
    %v433 = vshrl.u32 %v431, 16
    %v434 = vand.u32 %v430, 65535
    %v435 = vshrl.u32 %v430, 16
    %v436 = vmul.u32 %v432, %v434
    %v437 = vmul.u32 %v432, %v435
    %v438 = vmul.u32 %v433, %v434
    %v439 = vmul.u32 %v433, %v435
    %v440 = vshll.u32 %v437, 16
    %v441 = vshrl.u32 %v437, 16
    %v442 = vshll.u32 %v438, 16
    %v443 = vshrl.u32 %v438, 16
    %vm444 = vc.u32 %v436, %v440
    %v445 = vsel %vm444, 1, 0
    %v446 = vadd.s32 %v436, %v440
    %v447 = vadd.s32 %v439, %v445
    %vm448 = vc.u32 %v446, %v442
    %v449 = vsel %vm448, 1, 0
    %v450 = vadd.s32 %v446, %v442
    %v451 = vadd.s32 %v447, %v449
    %v452 = vadd.s32 %v451, %v441
    %v453 = vadd.s32 %v452, %v443
    %v454 = vand.u32 %v431, 65535
    %v455 = vshrl.u32 %v431, 16
    %v456 = vand.u32 %v426, 65535
    %v457 = vshrl.u32 %v426, 16
    %v458 = vmul.u32 %v454, %v456
    %v459 = vmul.u32 %v454, %v457
    %v460 = vmul.u32 %v455, %v456
    %v461 = vmul.u32 %v455, %v457
    %v462 = vshll.u32 %v459, 16
    %v463 = vshrl.u32 %v459, 16
    %v464 = vshll.u32 %v460, 16
    %v465 = vshrl.u32 %v460, 16
    %vm466 = vc.u32 %v458, %v462
    %v467 = vsel %vm466, 1, 0
    %v468 = vadd.s32 %v458, %v462
    %v469 = vadd.s32 %v461, %v467
    %vm470 = vc.u32 %v468, %v464
    %v471 = vsel %vm470, 1, 0
    %v472 = vadd.s32 %v468, %v464
    %v473 = vadd.s32 %v469, %v471
    %v474 = vadd.s32 %v473, %v463
    %v475 = vadd.s32 %v474, %v465
    %v476 = vmul.u32 %v431, %v422
    %v477 = vadd.s32 %v453, %v472
    %vm478 = vc.u32 %v453, %v472
    %v479 = vadd.s32 %v475, 1
    %v480 = vsel %vm478, %v479, %v475
    %v481 = vadd.s32 %v476, %v480
    %v482 = vadd.s32 %v481, 536870912
    %v483 = vshrl.u32 %v482, 30
    %v484 = vshll.u32 %v483, 30
    %v485 = vsub.s32 %v481, %v484
    %vm486 = vcmp.lt.s32.totalorder %v485, 0
    %v487 = vsub.s32 0, %v485
    %v488 = vsel %vm486, %v487, %v485
    %v489 = vclz %v488
    %v490 = vsub.s32 %v489, 2
    %vm491 = vcmp.gt.s32.totalorder 0, %v490
    %v492 = vsel %vm491, 0, %v490
    %v493 = vsub.s32 32, %v492
    %v494 = vshll.u32 %v485, %v492
    %v495 = vshrl.u32 %v477, %v493
    %v496 = vor.u32 %v494, %v495
    %v497 = vsub.s32 4294967266, %v492
    %v498 = vadd.s32 %v497, 127
    %v499 = vshll.u32 %v498, 23
    %v500 = vor.u32 4788187, %v499
    %v501 = vand.u32 2147483647, %v500
    %v503 = vcvt.s32.f32 %v496
    %v504 = vmul.f32 %v503, %v501
    %v505 = vxor.u32 %v504, 2147483648
    %v506 = vsel %vm385, %v505, %v504
    %v507 = vsub.s32 4, %v483
    %v508 = vsel %vm385, %v507, %v483
    %v509 = vsel %vm384, %v381, %v506
    %v510 = vsel %vm384, 0, %v508
    %v511 = vmul.f32 %v509, %v509
    %v512 = vmul.f32 %v511, -0.001358992
    %v513 = vadd.f32 %v512, 0.041655596
    %v514 = vmul.f32 %v511, %v513
    %v515 = vadd.f32 %v514, -0.4999988
    %v516 = vmul.f32 %v511, %v515
    %v517 = vadd.f32 1.0, %v516
    %v518 = vmul.f32 %v509, %v509
    %v519 = vmul.f32 %v518, -0.00019511016
    %v520 = vadd.f32 %v519, 0.008332121
    %v521 = vmul.f32 %v518, %v520
    %v522 = vadd.f32 %v521, -0.16666654
    %v523 = vmul.f32 %v518, %v522
    %v524 = vadd.f32 %v523, 1.0
    %v525 = vmul.f32 %v524, %v509
    %vm526 = vweird.f32 %v381
    %v527 = vadd.s32 %v510, 3
    %v528 = vand.u32 %v527, 3
    %vm529 = vcmp.lt.s32.totalorder %v528, 2
    %vm530 = vcmp.eq.s32.totalorder %v528, 0
    %v531 = vxor.u32 %v525, 2147483648
    %v532 = vsel %vm530, %v517, %v531
    %vm533 = vcmp.eq.s32.totalorder %v528, 2
    %v534 = vxor.u32 %v517, 2147483648
    %v535 = vsel %vm533, %v534, %v525
    %v536 = vsel %vm529, %v532, %v535
    %v537 = vsel %vm526, nan, %v536
    %v538 = vand.u32 2147483647, %v382
    %vm539 = vcmp.le.f32.partialorder %v538, 0.7853982
    %vm540 = vcmp.lt.s32.totalorder %v382, 0
    %v541 = vand.u32 %v382, 2139095040
    %v542 = vshrl.u32 %v541, 23
    %v543 = vsub.s32 %v542, 127
    %v544 = vand.u32 2147483647, %v382
    %v545 = vand.u32 %v544, 8388607
    %v546 = vor.u32 %v545, 8388608
    %v547 = vsub.s32 0, %v546
    %v548 = vadd.s32 %v543, 1
    %vm549 = vcmp.gt.s32.totalorder %v548, 0
    %v550 = vsel %vm549, %v548, 0
    %v551 = vshrl.u32 %v550, 5
    %v552 = vand.u32 %v550, 31
    %v553 = vsub.s32 32, %v552
    %v554 = vshrl.u32 683565275, %v553
    %v555 = vshll.u32 683565275, %v552
    %v556 = vshrl.u32 2475754826, %v553
    %v557 = vor.u32 %v555, %v556
    %v558 = vshll.u32 2475754826, %v552
    %v559 = vshrl.u32 2131351028, %v553
    %v560 = vor.u32 %v558, %v559
    %v561 = vshll.u32 2131351028, %v552
    %v562 = vshrl.u32 2102212464, %v553
    %v563 = vor.u32 %v561, %v562
    %v564 = vshll.u32 2102212464, %v552
    %v565 = vshrl.u32 920167782, %v553
    %v566 = vor.u32 %v564, %v565
    %v567 = vshll.u32 920167782, %v552
    %v568 = vshrl.u32 1326507024, %v553
    %v569 = vor.u32 %v567, %v568
    %vm570 = vcmp.lt.s32.totalorder %v551, 1
    %vm571 = vcmp.lt.s32.totalorder %v551, 2
    %vm572 = vcmp.lt.s32.totalorder %v551, 3
    %vm573 = vcmp.lt.s32.totalorder %v551, 4
    %v574 = vsel %vm570, %v554, %v557
    %v575 = vsel %vm573, %v563, 2102212464
    %v576 = vsel %vm572, %v560, %v575
    %v577 = vsel %vm571, %v574, %v576
    %v578 = vsel %vm570, %v557, %v560
    %v579 = vsel %vm573, %v566, 920167782
    %v580 = vsel %vm572, %v563, %v579
    %v581 = vsel %vm571, %v578, %v580
    %v582 = vsel %vm570, %v560, %v563
    %v583 = vsel %vm573, %v569, 1326507024
    %v584 = vsel %vm572, %v566, %v583
    %v585 = vsel %vm571, %v582, %v584
    %v586 = vshll.u32 %v546, 8
    %v587 = vand.u32 %v586, 65535
    %v588 = vshrl.u32 %v586, 16
    %v589 = vand.u32 %v585, 65535
    %v590 = vshrl.u32 %v585, 16
    %v591 = vmul.u32 %v587, %v589
    %v592 = vmul.u32 %v587, %v590
    %v593 = vmul.u32 %v588, %v589
    %v594 = vmul.u32 %v588, %v590
    %v595 = vshll.u32 %v592, 16
    %v596 = vshrl.u32 %v592, 16
    %v597 = vshll.u32 %v593, 16
    %v598 = vshrl.u32 %v593, 16
    %vm599 = vc.u32 %v591, %v595
    %v600 = vsel %vm599, 1, 0
    %v601 = vadd.s32 %v591, %v595
    %v602 = vadd.s32 %v594, %v600
    %vm603 = vc.u32 %v601, %v597
    %v604 = vsel %vm603, 1, 0
    %v605 = vadd.s32 %v601, %v597
    %v606 = vadd.s32 %v602, %v604
    %v607 = vadd.s32 %v606, %v596
    %v608 = vadd.s32 %v607, %v598
    %v609 = vand.u32 %v586, 65535
    %v610 = vshrl.u32 %v586, 16
    %v611 = vand.u32 %v581, 65535
    %v612 = vshrl.u32 %v581, 16
    %v613 = vmul.u32 %v609, %v611
    %v614 = vmul.u32 %v609, %v612
    %v615 = vmul.u32 %v610, %v611
    %v616 = vmul.u32 %v610, %v612
    %v617 = vshll.u32 %v614, 16
    %v618 = vshrl.u32 %v614, 16
    %v619 = vshll.u32 %v615, 16
    %v620 = vshrl.u32 %v615, 16
    %vm621 = vc.u32 %v613, %v617
    %v622 = vsel %vm621, 1, 0
    %v623 = vadd.s32 %v613, %v617
    %v624 = vadd.s32 %v616, %v622
    %vm625 = vc.u32 %v623, %v619
    %v626 = vsel %vm625, 1, 0
    %v627 = vadd.s32 %v623, %v619
    %v628 = vadd.s32 %v624, %v626
    %v629 = vadd.s32 %v628, %v618
    %v630 = vadd.s32 %v629, %v620
    %v631 = vmul.u32 %v586, %v577
    %v632 = vadd.s32 %v608, %v627
    %vm633 = vc.u32 %v608, %v627
    %v634 = vadd.s32 %v630, 1
    %v635 = vsel %vm633, %v634, %v630
    %v636 = vadd.s32 %v631, %v635
    %v637 = vadd.s32 %v636, 536870912
    %v638 = vshrl.u32 %v637, 30
    %v639 = vshll.u32 %v638, 30
    %v640 = vsub.s32 %v636, %v639
    %vm641 = vcmp.lt.s32.totalorder %v640, 0
    %v642 = vsub.s32 0, %v640
    %v643 = vsel %vm641, %v642, %v640
    %v644 = vclz %v643
    %v645 = vsub.s32 %v644, 2
    %vm646 = vcmp.gt.s32.totalorder 0, %v645
    %v647 = vsel %vm646, 0, %v645
    %v648 = vsub.s32 32, %v647
    %v649 = vshll.u32 %v640, %v647
    %v650 = vshrl.u32 %v632, %v648
    %v651 = vor.u32 %v649, %v650
    %v652 = vsub.s32 4294967266, %v647
    %v653 = vadd.s32 %v652, 127
    %v654 = vshll.u32 %v653, 23
    %v655 = vor.u32 4788187, %v654
    %v656 = vand.u32 2147483647, %v655
    %v658 = vcvt.s32.f32 %v651
    %v659 = vmul.f32 %v658, %v656
    %v660 = vxor.u32 %v659, 2147483648
    %v661 = vsel %vm540, %v660, %v659
    %v662 = vsub.s32 4, %v638
    %v663 = vsel %vm540, %v662, %v638
    %v664 = vsel %vm539, %v382, %v661
    %v665 = vsel %vm539, 0, %v663
    %v666 = vmul.f32 %v664, %v664
    %v667 = vmul.f32 %v666, -0.001358992
    %v668 = vadd.f32 %v667, 0.041655596
    %v669 = vmul.f32 %v666, %v668
    %v670 = vadd.f32 %v669, -0.4999988
    %v671 = vmul.f32 %v666, %v670
    %v672 = vadd.f32 1.0, %v671
    %v673 = vmul.f32 %v664, %v664
    %v674 = vmul.f32 %v673, -0.00019511016
    %v675 = vadd.f32 %v674, 0.008332121
    %v676 = vmul.f32 %v673, %v675
    %v677 = vadd.f32 %v676, -0.16666654
    %v678 = vmul.f32 %v673, %v677
    %v679 = vadd.f32 %v678, 1.0
    %v680 = vmul.f32 %v679, %v664
    %vm681 = vweird.f32 %v382
    %v682 = vadd.s32 %v665, 3
    %v683 = vand.u32 %v682, 3
    %vm684 = vcmp.lt.s32.totalorder %v683, 2
    %vm685 = vcmp.eq.s32.totalorder %v683, 0
    %v686 = vxor.u32 %v680, 2147483648
    %v687 = vsel %vm685, %v672, %v686
    %vm688 = vcmp.eq.s32.totalorder %v683, 2
    %v689 = vxor.u32 %v672, 2147483648
    %v690 = vsel %vm688, %v689, %v680
    %v691 = vsel %vm684, %v687, %v690
    %v692 = vsel %vm681, nan, %v691
    %v693 = vstv %s374
    %v694 = vmul.f32 %v693, %v537
    %v695 = vmul.f32 %v693, %v692
    %v696 = vadd.f32 %v372, %v694
    %v697 = vadd.f32 %v373, %v695
    %s698 = sld [smem:[#allocation3 + $0x2]]
    %s699 = sld [smem:[#allocation4 + $0x2]]
    %v700 = vstv %s699
    %v701 = vmul.f32 %v700, %v46
    %v702 = vmul.f32 %v700, %v47
    %s703 = sld [smem:[#allocation5 + $0x2]]
    %v704 = vstv %s703
    %v705 = vadd.f32 %v701, %v704
    %v706 = vadd.f32 %v702, %v704
    %v707 = vand.u32 2147483647, %v705
    %vm708 = vcmp.le.f32.partialorder %v707, 0.7853982
    %vm709 = vcmp.lt.s32.totalorder %v705, 0
    %v710 = vand.u32 %v705, 2139095040
    %v711 = vshrl.u32 %v710, 23
    %v712 = vsub.s32 %v711, 127
    %v713 = vand.u32 2147483647, %v705
    %v714 = vand.u32 %v713, 8388607
    %v715 = vor.u32 %v714, 8388608
    %v716 = vsub.s32 0, %v715
    %v717 = vadd.s32 %v712, 1
    %vm718 = vcmp.gt.s32.totalorder %v717, 0
    %v719 = vsel %vm718, %v717, 0
    %v720 = vshrl.u32 %v719, 5
    %v721 = vand.u32 %v719, 31
    %v722 = vsub.s32 32, %v721
    %v723 = vshrl.u32 683565275, %v722
    %v724 = vshll.u32 683565275, %v721
    %v725 = vshrl.u32 2475754826, %v722
    %v726 = vor.u32 %v724, %v725
    %v727 = vshll.u32 2475754826, %v721
    %v728 = vshrl.u32 2131351028, %v722
    %v729 = vor.u32 %v727, %v728
    %v730 = vshll.u32 2131351028, %v721
    %v731 = vshrl.u32 2102212464, %v722
    %v732 = vor.u32 %v730, %v731
    %v733 = vshll.u32 2102212464, %v721
    %v734 = vshrl.u32 920167782, %v722
    %v735 = vor.u32 %v733, %v734
    %v736 = vshll.u32 920167782, %v721
    %v737 = vshrl.u32 1326507024, %v722
    %v738 = vor.u32 %v736, %v737
    %vm739 = vcmp.lt.s32.totalorder %v720, 1
    %vm740 = vcmp.lt.s32.totalorder %v720, 2
    %vm741 = vcmp.lt.s32.totalorder %v720, 3
    %vm742 = vcmp.lt.s32.totalorder %v720, 4
    %v743 = vsel %vm739, %v723, %v726
    %v744 = vsel %vm742, %v732, 2102212464
    %v745 = vsel %vm741, %v729, %v744
    %v746 = vsel %vm740, %v743, %v745
    %v747 = vsel %vm739, %v726, %v729
    %v748 = vsel %vm742, %v735, 920167782
    %v749 = vsel %vm741, %v732, %v748
    %v750 = vsel %vm740, %v747, %v749
    %v751 = vsel %vm739, %v729, %v732
    %v752 = vsel %vm742, %v738, 1326507024
    %v753 = vsel %vm741, %v735, %v752
    %v754 = vsel %vm740, %v751, %v753
    %v755 = vshll.u32 %v715, 8
    %v756 = vand.u32 %v755, 65535
    %v757 = vshrl.u32 %v755, 16
    %v758 = vand.u32 %v754, 65535
    %v759 = vshrl.u32 %v754, 16
    %v760 = vmul.u32 %v756, %v758
    %v761 = vmul.u32 %v756, %v759
    %v762 = vmul.u32 %v757, %v758
    %v763 = vmul.u32 %v757, %v759
    %v764 = vshll.u32 %v761, 16
    %v765 = vshrl.u32 %v761, 16
    %v766 = vshll.u32 %v762, 16
    %v767 = vshrl.u32 %v762, 16
    %vm768 = vc.u32 %v760, %v764
    %v769 = vsel %vm768, 1, 0
    %v770 = vadd.s32 %v760, %v764
    %v771 = vadd.s32 %v763, %v769
    %vm772 = vc.u32 %v770, %v766
    %v773 = vsel %vm772, 1, 0
    %v774 = vadd.s32 %v770, %v766
    %v775 = vadd.s32 %v771, %v773
    %v776 = vadd.s32 %v775, %v765
    %v777 = vadd.s32 %v776, %v767
    %v778 = vand.u32 %v755, 65535
    %v779 = vshrl.u32 %v755, 16
    %v780 = vand.u32 %v750, 65535
    %v781 = vshrl.u32 %v750, 16
    %v782 = vmul.u32 %v778, %v780
    %v783 = vmul.u32 %v778, %v781
    %v784 = vmul.u32 %v779, %v780
    %v785 = vmul.u32 %v779, %v781
    %v786 = vshll.u32 %v783, 16
    %v787 = vshrl.u32 %v783, 16
    %v788 = vshll.u32 %v784, 16
    %v789 = vshrl.u32 %v784, 16
    %vm790 = vc.u32 %v782, %v786
    %v791 = vsel %vm790, 1, 0
    %v792 = vadd.s32 %v782, %v786
    %v793 = vadd.s32 %v785, %v791
    %vm794 = vc.u32 %v792, %v788
    %v795 = vsel %vm794, 1, 0
    %v796 = vadd.s32 %v792, %v788
    %v797 = vadd.s32 %v793, %v795
    %v798 = vadd.s32 %v797, %v787
    %v799 = vadd.s32 %v798, %v789
    %v800 = vmul.u32 %v755, %v746
    %v801 = vadd.s32 %v777, %v796
    %vm802 = vc.u32 %v777, %v796
    %v803 = vadd.s32 %v799, 1
    %v804 = vsel %vm802, %v803, %v799
    %v805 = vadd.s32 %v800, %v804
    %v806 = vadd.s32 %v805, 536870912
    %v807 = vshrl.u32 %v806, 30
    %v808 = vshll.u32 %v807, 30
    %v809 = vsub.s32 %v805, %v808
    %vm810 = vcmp.lt.s32.totalorder %v809, 0
    %v811 = vsub.s32 0, %v809
    %v812 = vsel %vm810, %v811, %v809
    %v813 = vclz %v812
    %v814 = vsub.s32 %v813, 2
    %vm815 = vcmp.gt.s32.totalorder 0, %v814
    %v816 = vsel %vm815, 0, %v814
    %v817 = vsub.s32 32, %v816
    %v818 = vshll.u32 %v809, %v816
    %v819 = vshrl.u32 %v801, %v817
    %v820 = vor.u32 %v818, %v819
    %v821 = vsub.s32 4294967266, %v816
    %v822 = vadd.s32 %v821, 127
    %v823 = vshll.u32 %v822, 23
    %v824 = vor.u32 4788187, %v823
    %v825 = vand.u32 2147483647, %v824
    %v827 = vcvt.s32.f32 %v820
    %v828 = vmul.f32 %v827, %v825
    %v829 = vxor.u32 %v828, 2147483648
    %v830 = vsel %vm709, %v829, %v828
    %v831 = vsub.s32 4, %v807
    %v832 = vsel %vm709, %v831, %v807
    %v833 = vsel %vm708, %v705, %v830
    %v834 = vsel %vm708, 0, %v832
    %v835 = vmul.f32 %v833, %v833
    %v836 = vmul.f32 %v835, -0.001358992
    %v837 = vadd.f32 %v836, 0.041655596
    %v838 = vmul.f32 %v835, %v837
    %v839 = vadd.f32 %v838, -0.4999988
    %v840 = vmul.f32 %v835, %v839
    %v841 = vadd.f32 1.0, %v840
    %v842 = vmul.f32 %v833, %v833
    %v843 = vmul.f32 %v842, -0.00019511016
    %v844 = vadd.f32 %v843, 0.008332121
    %v845 = vmul.f32 %v842, %v844
    %v846 = vadd.f32 %v845, -0.16666654
    %v847 = vmul.f32 %v842, %v846
    %v848 = vadd.f32 %v847, 1.0
    %v849 = vmul.f32 %v848, %v833
    %vm850 = vweird.f32 %v705
    %v851 = vadd.s32 %v834, 3
    %v852 = vand.u32 %v851, 3
    %vm853 = vcmp.lt.s32.totalorder %v852, 2
    %vm854 = vcmp.eq.s32.totalorder %v852, 0
    %v855 = vxor.u32 %v849, 2147483648
    %v856 = vsel %vm854, %v841, %v855
    %vm857 = vcmp.eq.s32.totalorder %v852, 2
    %v858 = vxor.u32 %v841, 2147483648
    %v859 = vsel %vm857, %v858, %v849
    %v860 = vsel %vm853, %v856, %v859
    %v861 = vsel %vm850, nan, %v860
    %v862 = vand.u32 2147483647, %v706
    %vm863 = vcmp.le.f32.partialorder %v862, 0.7853982
    %vm864 = vcmp.lt.s32.totalorder %v706, 0
    %v865 = vand.u32 %v706, 2139095040
    %v866 = vshrl.u32 %v865, 23
    %v867 = vsub.s32 %v866, 127
    %v868 = vand.u32 2147483647, %v706
    %v869 = vand.u32 %v868, 8388607
    %v870 = vor.u32 %v869, 8388608
    %v871 = vsub.s32 0, %v870
    %v872 = vadd.s32 %v867, 1
    %vm873 = vcmp.gt.s32.totalorder %v872, 0
    %v874 = vsel %vm873, %v872, 0
    %v875 = vshrl.u32 %v874, 5
    %v876 = vand.u32 %v874, 31
    %v877 = vsub.s32 32, %v876
    %v878 = vshrl.u32 683565275, %v877
    %v879 = vshll.u32 683565275, %v876
    %v880 = vshrl.u32 2475754826, %v877
    %v881 = vor.u32 %v879, %v880
    %v882 = vshll.u32 2475754826, %v876
    %v883 = vshrl.u32 2131351028, %v877
    %v884 = vor.u32 %v882, %v883
    %v885 = vshll.u32 2131351028, %v876
    %v886 = vshrl.u32 2102212464, %v877
    %v887 = vor.u32 %v885, %v886
    %v888 = vshll.u32 2102212464, %v876
    %v889 = vshrl.u32 920167782, %v877
    %v890 = vor.u32 %v888, %v889
    %v891 = vshll.u32 920167782, %v876
    %v892 = vshrl.u32 1326507024, %v877
    %v893 = vor.u32 %v891, %v892
    %vm894 = vcmp.lt.s32.totalorder %v875, 1
    %vm895 = vcmp.lt.s32.totalorder %v875, 2
    %vm896 = vcmp.lt.s32.totalorder %v875, 3
    %vm897 = vcmp.lt.s32.totalorder %v875, 4
    %v898 = vsel %vm894, %v878, %v881
    %v899 = vsel %vm897, %v887, 2102212464
    %v900 = vsel %vm896, %v884, %v899
    %v901 = vsel %vm895, %v898, %v900
    %v902 = vsel %vm894, %v881, %v884
    %v903 = vsel %vm897, %v890, 920167782
    %v904 = vsel %vm896, %v887, %v903
    %v905 = vsel %vm895, %v902, %v904
    %v906 = vsel %vm894, %v884, %v887
    %v907 = vsel %vm897, %v893, 1326507024
    %v908 = vsel %vm896, %v890, %v907
    %v909 = vsel %vm895, %v906, %v908
    %v910 = vshll.u32 %v870, 8
    %v911 = vand.u32 %v910, 65535
    %v912 = vshrl.u32 %v910, 16
    %v913 = vand.u32 %v909, 65535
    %v914 = vshrl.u32 %v909, 16
    %v915 = vmul.u32 %v911, %v913
    %v916 = vmul.u32 %v911, %v914
    %v917 = vmul.u32 %v912, %v913
    %v918 = vmul.u32 %v912, %v914
    %v919 = vshll.u32 %v916, 16
    %v920 = vshrl.u32 %v916, 16
    %v921 = vshll.u32 %v917, 16
    %v922 = vshrl.u32 %v917, 16
    %vm923 = vc.u32 %v915, %v919
    %v924 = vsel %vm923, 1, 0
    %v925 = vadd.s32 %v915, %v919
    %v926 = vadd.s32 %v918, %v924
    %vm927 = vc.u32 %v925, %v921
    %v928 = vsel %vm927, 1, 0
    %v929 = vadd.s32 %v925, %v921
    %v930 = vadd.s32 %v926, %v928
    %v931 = vadd.s32 %v930, %v920
    %v932 = vadd.s32 %v931, %v922
    %v933 = vand.u32 %v910, 65535
    %v934 = vshrl.u32 %v910, 16
    %v935 = vand.u32 %v905, 65535
    %v936 = vshrl.u32 %v905, 16
    %v937 = vmul.u32 %v933, %v935
    %v938 = vmul.u32 %v933, %v936
    %v939 = vmul.u32 %v934, %v935
    %v940 = vmul.u32 %v934, %v936
    %v941 = vshll.u32 %v938, 16
    %v942 = vshrl.u32 %v938, 16
    %v943 = vshll.u32 %v939, 16
    %v944 = vshrl.u32 %v939, 16
    %vm945 = vc.u32 %v937, %v941
    %v946 = vsel %vm945, 1, 0
    %v947 = vadd.s32 %v937, %v941
    %v948 = vadd.s32 %v940, %v946
    %vm949 = vc.u32 %v947, %v943
    %v950 = vsel %vm949, 1, 0
    %v951 = vadd.s32 %v947, %v943
    %v952 = vadd.s32 %v948, %v950
    %v953 = vadd.s32 %v952, %v942
    %v954 = vadd.s32 %v953, %v944
    %v955 = vmul.u32 %v910, %v901
    %v956 = vadd.s32 %v932, %v951
    %vm957 = vc.u32 %v932, %v951
    %v958 = vadd.s32 %v954, 1
    %v959 = vsel %vm957, %v958, %v954
    %v960 = vadd.s32 %v955, %v959
    %v961 = vadd.s32 %v960, 536870912
    %v962 = vshrl.u32 %v961, 30
    %v963 = vshll.u32 %v962, 30
    %v964 = vsub.s32 %v960, %v963
    %vm965 = vcmp.lt.s32.totalorder %v964, 0
    %v966 = vsub.s32 0, %v964
    %v967 = vsel %vm965, %v966, %v964
    %v968 = vclz %v967
    %v969 = vsub.s32 %v968, 2
    %vm970 = vcmp.gt.s32.totalorder 0, %v969
    %v971 = vsel %vm970, 0, %v969
    %v972 = vsub.s32 32, %v971
    %v973 = vshll.u32 %v964, %v971
    %v974 = vshrl.u32 %v956, %v972
    %v975 = vor.u32 %v973, %v974
    %v976 = vsub.s32 4294967266, %v971
    %v977 = vadd.s32 %v976, 127
    %v978 = vshll.u32 %v977, 23
    %v979 = vor.u32 4788187, %v978
    %v980 = vand.u32 2147483647, %v979
    %v982 = vcvt.s32.f32 %v975
    %v983 = vmul.f32 %v982, %v980
    %v984 = vxor.u32 %v983, 2147483648
    %v985 = vsel %vm864, %v984, %v983
    %v986 = vsub.s32 4, %v962
    %v987 = vsel %vm864, %v986, %v962
    %v988 = vsel %vm863, %v706, %v985
    %v989 = vsel %vm863, 0, %v987
    %v990 = vmul.f32 %v988, %v988
    %v991 = vmul.f32 %v990, -0.001358992
    %v992 = vadd.f32 %v991, 0.041655596
    %v993 = vmul.f32 %v990, %v992
    %v994 = vadd.f32 %v993, -0.4999988
    %v995 = vmul.f32 %v990, %v994
    %v996 = vadd.f32 1.0, %v995
    %v997 = vmul.f32 %v988, %v988
    %v998 = vmul.f32 %v997, -0.00019511016
    %v999 = vadd.f32 %v998, 0.008332121
    %v1000 = vmul.f32 %v997, %v999
    %v1001 = vadd.f32 %v1000, -0.16666654
    %v1002 = vmul.f32 %v997, %v1001
    %v1003 = vadd.f32 %v1002, 1.0
    %v1004 = vmul.f32 %v1003, %v988
    %vm1005 = vweird.f32 %v706
    %v1006 = vadd.s32 %v989, 3
    %v1007 = vand.u32 %v1006, 3
    %vm1008 = vcmp.lt.s32.totalorder %v1007, 2
    %vm1009 = vcmp.eq.s32.totalorder %v1007, 0
    %v1010 = vxor.u32 %v1004, 2147483648
    %v1011 = vsel %vm1009, %v996, %v1010
    %vm1012 = vcmp.eq.s32.totalorder %v1007, 2
    %v1013 = vxor.u32 %v996, 2147483648
    %v1014 = vsel %vm1012, %v1013, %v1004
    %v1015 = vsel %vm1008, %v1011, %v1014
    %v1016 = vsel %vm1005, nan, %v1015
    %v1017 = vstv %s698
    %v1018 = vmul.f32 %v1017, %v861
    %v1019 = vmul.f32 %v1017, %v1016
    %v1020 = vadd.f32 %v696, %v1018
    %v1021 = vadd.f32 %v697, %v1019
    %s1022 = sld [smem:[#allocation3 + $0x3]]
    %s1023 = sld [smem:[#allocation4 + $0x3]]
    %v1024 = vstv %s1023
    %v1025 = vmul.f32 %v1024, %v46
    %v1026 = vmul.f32 %v1024, %v47
    %s1027 = sld [smem:[#allocation5 + $0x3]]
    %v1028 = vstv %s1027
    %v1029 = vadd.f32 %v1025, %v1028
    %v1030 = vadd.f32 %v1026, %v1028
    %v1031 = vand.u32 2147483647, %v1029
    %vm1032 = vcmp.le.f32.partialorder %v1031, 0.7853982
    %vm1033 = vcmp.lt.s32.totalorder %v1029, 0
    %v1034 = vand.u32 %v1029, 2139095040
    %v1035 = vshrl.u32 %v1034, 23
    %v1036 = vsub.s32 %v1035, 127
    %v1037 = vand.u32 2147483647, %v1029
    %v1038 = vand.u32 %v1037, 8388607
    %v1039 = vor.u32 %v1038, 8388608
    %v1040 = vsub.s32 0, %v1039
    %v1041 = vadd.s32 %v1036, 1
    %vm1042 = vcmp.gt.s32.totalorder %v1041, 0
    %v1043 = vsel %vm1042, %v1041, 0
    %v1044 = vshrl.u32 %v1043, 5
    %v1045 = vand.u32 %v1043, 31
    %v1046 = vsub.s32 32, %v1045
    %v1047 = vshrl.u32 683565275, %v1046
    %v1048 = vshll.u32 683565275, %v1045
    %v1049 = vshrl.u32 2475754826, %v1046
    %v1050 = vor.u32 %v1048, %v1049
    %v1051 = vshll.u32 2475754826, %v1045
    %v1052 = vshrl.u32 2131351028, %v1046
    %v1053 = vor.u32 %v1051, %v1052
    %v1054 = vshll.u32 2131351028, %v1045
    %v1055 = vshrl.u32 2102212464, %v1046
    %v1056 = vor.u32 %v1054, %v1055
    %v1057 = vshll.u32 2102212464, %v1045
    %v1058 = vshrl.u32 920167782, %v1046
    %v1059 = vor.u32 %v1057, %v1058
    %v1060 = vshll.u32 920167782, %v1045
    %v1061 = vshrl.u32 1326507024, %v1046
    %v1062 = vor.u32 %v1060, %v1061
    %vm1063 = vcmp.lt.s32.totalorder %v1044, 1
    %vm1064 = vcmp.lt.s32.totalorder %v1044, 2
    %vm1065 = vcmp.lt.s32.totalorder %v1044, 3
    %vm1066 = vcmp.lt.s32.totalorder %v1044, 4
    %v1067 = vsel %vm1063, %v1047, %v1050
    %v1068 = vsel %vm1066, %v1056, 2102212464
    %v1069 = vsel %vm1065, %v1053, %v1068
    %v1070 = vsel %vm1064, %v1067, %v1069
    %v1071 = vsel %vm1063, %v1050, %v1053
    %v1072 = vsel %vm1066, %v1059, 920167782
    %v1073 = vsel %vm1065, %v1056, %v1072
    %v1074 = vsel %vm1064, %v1071, %v1073
    %v1075 = vsel %vm1063, %v1053, %v1056
    %v1076 = vsel %vm1066, %v1062, 1326507024
    %v1077 = vsel %vm1065, %v1059, %v1076
    %v1078 = vsel %vm1064, %v1075, %v1077
    %v1079 = vshll.u32 %v1039, 8
    %v1080 = vand.u32 %v1079, 65535
    %v1081 = vshrl.u32 %v1079, 16
    %v1082 = vand.u32 %v1078, 65535
    %v1083 = vshrl.u32 %v1078, 16
    %v1084 = vmul.u32 %v1080, %v1082
    %v1085 = vmul.u32 %v1080, %v1083
    %v1086 = vmul.u32 %v1081, %v1082
    %v1087 = vmul.u32 %v1081, %v1083
    %v1088 = vshll.u32 %v1085, 16
    %v1089 = vshrl.u32 %v1085, 16
    %v1090 = vshll.u32 %v1086, 16
    %v1091 = vshrl.u32 %v1086, 16
    %vm1092 = vc.u32 %v1084, %v1088
    %v1093 = vsel %vm1092, 1, 0
    %v1094 = vadd.s32 %v1084, %v1088
    %v1095 = vadd.s32 %v1087, %v1093
    %vm1096 = vc.u32 %v1094, %v1090
    %v1097 = vsel %vm1096, 1, 0
    %v1098 = vadd.s32 %v1094, %v1090
    %v1099 = vadd.s32 %v1095, %v1097
    %v1100 = vadd.s32 %v1099, %v1089
    %v1101 = vadd.s32 %v1100, %v1091
    %v1102 = vand.u32 %v1079, 65535
    %v1103 = vshrl.u32 %v1079, 16
    %v1104 = vand.u32 %v1074, 65535
    %v1105 = vshrl.u32 %v1074, 16
    %v1106 = vmul.u32 %v1102, %v1104
    %v1107 = vmul.u32 %v1102, %v1105
    %v1108 = vmul.u32 %v1103, %v1104
    %v1109 = vmul.u32 %v1103, %v1105
    %v1110 = vshll.u32 %v1107, 16
    %v1111 = vshrl.u32 %v1107, 16
    %v1112 = vshll.u32 %v1108, 16
    %v1113 = vshrl.u32 %v1108, 16
    %vm1114 = vc.u32 %v1106, %v1110
    %v1115 = vsel %vm1114, 1, 0
    %v1116 = vadd.s32 %v1106, %v1110
    %v1117 = vadd.s32 %v1109, %v1115
    %vm1118 = vc.u32 %v1116, %v1112
    %v1119 = vsel %vm1118, 1, 0
    %v1120 = vadd.s32 %v1116, %v1112
    %v1121 = vadd.s32 %v1117, %v1119
    %v1122 = vadd.s32 %v1121, %v1111
    %v1123 = vadd.s32 %v1122, %v1113
    %v1124 = vmul.u32 %v1079, %v1070
    %v1125 = vadd.s32 %v1101, %v1120
    %vm1126 = vc.u32 %v1101, %v1120
    %v1127 = vadd.s32 %v1123, 1
    %v1128 = vsel %vm1126, %v1127, %v1123
    %v1129 = vadd.s32 %v1124, %v1128
    %v1130 = vadd.s32 %v1129, 536870912
    %v1131 = vshrl.u32 %v1130, 30
    %v1132 = vshll.u32 %v1131, 30
    %v1133 = vsub.s32 %v1129, %v1132
    %vm1134 = vcmp.lt.s32.totalorder %v1133, 0
    %v1135 = vsub.s32 0, %v1133
    %v1136 = vsel %vm1134, %v1135, %v1133
    %v1137 = vclz %v1136
    %v1138 = vsub.s32 %v1137, 2
    %vm1139 = vcmp.gt.s32.totalorder 0, %v1138
    %v1140 = vsel %vm1139, 0, %v1138
    %v1141 = vsub.s32 32, %v1140
    %v1142 = vshll.u32 %v1133, %v1140
    %v1143 = vshrl.u32 %v1125, %v1141
    %v1144 = vor.u32 %v1142, %v1143
    %v1145 = vsub.s32 4294967266, %v1140
    %v1146 = vadd.s32 %v1145, 127
    %v1147 = vshll.u32 %v1146, 23
    %v1148 = vor.u32 4788187, %v1147
    %v1149 = vand.u32 2147483647, %v1148
    %v1151 = vcvt.s32.f32 %v1144
    %v1152 = vmul.f32 %v1151, %v1149
    %v1153 = vxor.u32 %v1152, 2147483648
    %v1154 = vsel %vm1033, %v1153, %v1152
    %v1155 = vsub.s32 4, %v1131
    %v1156 = vsel %vm1033, %v1155, %v1131
    %v1157 = vsel %vm1032, %v1029, %v1154
    %v1158 = vsel %vm1032, 0, %v1156
    %v1159 = vmul.f32 %v1157, %v1157
    %v1160 = vmul.f32 %v1159, -0.001358992
    %v1161 = vadd.f32 %v1160, 0.041655596
    %v1162 = vmul.f32 %v1159, %v1161
    %v1163 = vadd.f32 %v1162, -0.4999988
    %v1164 = vmul.f32 %v1159, %v1163
    %v1165 = vadd.f32 1.0, %v1164
    %v1166 = vmul.f32 %v1157, %v1157
    %v1167 = vmul.f32 %v1166, -0.00019511016
    %v1168 = vadd.f32 %v1167, 0.008332121
    %v1169 = vmul.f32 %v1166, %v1168
    %v1170 = vadd.f32 %v1169, -0.16666654
    %v1171 = vmul.f32 %v1166, %v1170
    %v1172 = vadd.f32 %v1171, 1.0
    %v1173 = vmul.f32 %v1172, %v1157
    %vm1174 = vweird.f32 %v1029
    %v1175 = vadd.s32 %v1158, 3
    %v1176 = vand.u32 %v1175, 3
    %vm1177 = vcmp.lt.s32.totalorder %v1176, 2
    %vm1178 = vcmp.eq.s32.totalorder %v1176, 0
    %v1179 = vxor.u32 %v1173, 2147483648
    %v1180 = vsel %vm1178, %v1165, %v1179
    %vm1181 = vcmp.eq.s32.totalorder %v1176, 2
    %v1182 = vxor.u32 %v1165, 2147483648
    %v1183 = vsel %vm1181, %v1182, %v1173
    %v1184 = vsel %vm1177, %v1180, %v1183
    %v1185 = vsel %vm1174, nan, %v1184
    %v1186 = vand.u32 2147483647, %v1030
    %vm1187 = vcmp.le.f32.partialorder %v1186, 0.7853982
    %vm1188 = vcmp.lt.s32.totalorder %v1030, 0
    %v1189 = vand.u32 %v1030, 2139095040
    %v1190 = vshrl.u32 %v1189, 23
    %v1191 = vsub.s32 %v1190, 127
    %v1192 = vand.u32 2147483647, %v1030
    %v1193 = vand.u32 %v1192, 8388607
    %v1194 = vor.u32 %v1193, 8388608
    %v1195 = vsub.s32 0, %v1194
    %v1196 = vadd.s32 %v1191, 1
    %vm1197 = vcmp.gt.s32.totalorder %v1196, 0
    %v1198 = vsel %vm1197, %v1196, 0
    %v1199 = vshrl.u32 %v1198, 5
    %v1200 = vand.u32 %v1198, 31
    %v1201 = vsub.s32 32, %v1200
    %v1202 = vshrl.u32 683565275, %v1201
    %v1203 = vshll.u32 683565275, %v1200
    %v1204 = vshrl.u32 2475754826, %v1201
    %v1205 = vor.u32 %v1203, %v1204
    %v1206 = vshll.u32 2475754826, %v1200
    %v1207 = vshrl.u32 2131351028, %v1201
    %v1208 = vor.u32 %v1206, %v1207
    %v1209 = vshll.u32 2131351028, %v1200
    %v1210 = vshrl.u32 2102212464, %v1201
    %v1211 = vor.u32 %v1209, %v1210
    %v1212 = vshll.u32 2102212464, %v1200
    %v1213 = vshrl.u32 920167782, %v1201
    %v1214 = vor.u32 %v1212, %v1213
    %v1215 = vshll.u32 920167782, %v1200
    %v1216 = vshrl.u32 1326507024, %v1201
    %v1217 = vor.u32 %v1215, %v1216
    %vm1218 = vcmp.lt.s32.totalorder %v1199, 1
    %vm1219 = vcmp.lt.s32.totalorder %v1199, 2
    %vm1220 = vcmp.lt.s32.totalorder %v1199, 3
    %vm1221 = vcmp.lt.s32.totalorder %v1199, 4
    %v1222 = vsel %vm1218, %v1202, %v1205
    %v1223 = vsel %vm1221, %v1211, 2102212464
    %v1224 = vsel %vm1220, %v1208, %v1223
    %v1225 = vsel %vm1219, %v1222, %v1224
    %v1226 = vsel %vm1218, %v1205, %v1208
    %v1227 = vsel %vm1221, %v1214, 920167782
    %v1228 = vsel %vm1220, %v1211, %v1227
    %v1229 = vsel %vm1219, %v1226, %v1228
    %v1230 = vsel %vm1218, %v1208, %v1211
    %v1231 = vsel %vm1221, %v1217, 1326507024
    %v1232 = vsel %vm1220, %v1214, %v1231
    %v1233 = vsel %vm1219, %v1230, %v1232
    %v1234 = vshll.u32 %v1194, 8
    %v1235 = vand.u32 %v1234, 65535
    %v1236 = vshrl.u32 %v1234, 16
    %v1237 = vand.u32 %v1233, 65535
    %v1238 = vshrl.u32 %v1233, 16
    %v1239 = vmul.u32 %v1235, %v1237
    %v1240 = vmul.u32 %v1235, %v1238
    %v1241 = vmul.u32 %v1236, %v1237
    %v1242 = vmul.u32 %v1236, %v1238
    %v1243 = vshll.u32 %v1240, 16
    %v1244 = vshrl.u32 %v1240, 16
    %v1245 = vshll.u32 %v1241, 16
    %v1246 = vshrl.u32 %v1241, 16
    %vm1247 = vc.u32 %v1239, %v1243
    %v1248 = vsel %vm1247, 1, 0
    %v1249 = vadd.s32 %v1239, %v1243
    %v1250 = vadd.s32 %v1242, %v1248
    %vm1251 = vc.u32 %v1249, %v1245
    %v1252 = vsel %vm1251, 1, 0
    %v1253 = vadd.s32 %v1249, %v1245
    %v1254 = vadd.s32 %v1250, %v1252
    %v1255 = vadd.s32 %v1254, %v1244
    %v1256 = vadd.s32 %v1255, %v1246
    %v1257 = vand.u32 %v1234, 65535
    %v1258 = vshrl.u32 %v1234, 16
    %v1259 = vand.u32 %v1229, 65535
    %v1260 = vshrl.u32 %v1229, 16
    %v1261 = vmul.u32 %v1257, %v1259
    %v1262 = vmul.u32 %v1257, %v1260
    %v1263 = vmul.u32 %v1258, %v1259
    %v1264 = vmul.u32 %v1258, %v1260
    %v1265 = vshll.u32 %v1262, 16
    %v1266 = vshrl.u32 %v1262, 16
    %v1267 = vshll.u32 %v1263, 16
    %v1268 = vshrl.u32 %v1263, 16
    %vm1269 = vc.u32 %v1261, %v1265
    %v1270 = vsel %vm1269, 1, 0
    %v1271 = vadd.s32 %v1261, %v1265
    %v1272 = vadd.s32 %v1264, %v1270
    %vm1273 = vc.u32 %v1271, %v1267
    %v1274 = vsel %vm1273, 1, 0
    %v1275 = vadd.s32 %v1271, %v1267
    %v1276 = vadd.s32 %v1272, %v1274
    %v1277 = vadd.s32 %v1276, %v1266
    %v1278 = vadd.s32 %v1277, %v1268
    %v1279 = vmul.u32 %v1234, %v1225
    %v1280 = vadd.s32 %v1256, %v1275
    %vm1281 = vc.u32 %v1256, %v1275
    %v1282 = vadd.s32 %v1278, 1
    %v1283 = vsel %vm1281, %v1282, %v1278
    %v1284 = vadd.s32 %v1279, %v1283
    %v1285 = vadd.s32 %v1284, 536870912
    %v1286 = vshrl.u32 %v1285, 30
    %v1287 = vshll.u32 %v1286, 30
    %v1288 = vsub.s32 %v1284, %v1287
    %vm1289 = vcmp.lt.s32.totalorder %v1288, 0
    %v1290 = vsub.s32 0, %v1288
    %v1291 = vsel %vm1289, %v1290, %v1288
    %v1292 = vclz %v1291
    %v1293 = vsub.s32 %v1292, 2
    %vm1294 = vcmp.gt.s32.totalorder 0, %v1293
    %v1295 = vsel %vm1294, 0, %v1293
    %v1296 = vsub.s32 32, %v1295
    %v1297 = vshll.u32 %v1288, %v1295
    %v1298 = vshrl.u32 %v1280, %v1296
    %v1299 = vor.u32 %v1297, %v1298
    %v1300 = vsub.s32 4294967266, %v1295
    %v1301 = vadd.s32 %v1300, 127
    %v1302 = vshll.u32 %v1301, 23
    %v1303 = vor.u32 4788187, %v1302
    %v1304 = vand.u32 2147483647, %v1303
    %v1306 = vcvt.s32.f32 %v1299
    %v1307 = vmul.f32 %v1306, %v1304
    %v1308 = vxor.u32 %v1307, 2147483648
    %v1309 = vsel %vm1188, %v1308, %v1307
    %v1310 = vsub.s32 4, %v1286
    %v1311 = vsel %vm1188, %v1310, %v1286
    %v1312 = vsel %vm1187, %v1030, %v1309
    %v1313 = vsel %vm1187, 0, %v1311
    %v1314 = vmul.f32 %v1312, %v1312
    %v1315 = vmul.f32 %v1314, -0.001358992
    %v1316 = vadd.f32 %v1315, 0.041655596
    %v1317 = vmul.f32 %v1314, %v1316
    %v1318 = vadd.f32 %v1317, -0.4999988
    %v1319 = vmul.f32 %v1314, %v1318
    %v1320 = vadd.f32 1.0, %v1319
    %v1321 = vmul.f32 %v1312, %v1312
    %v1322 = vmul.f32 %v1321, -0.00019511016
    %v1323 = vadd.f32 %v1322, 0.008332121
    %v1324 = vmul.f32 %v1321, %v1323
    %v1325 = vadd.f32 %v1324, -0.16666654
    %v1326 = vmul.f32 %v1321, %v1325
    %v1327 = vadd.f32 %v1326, 1.0
    %v1328 = vmul.f32 %v1327, %v1312
    %vm1329 = vweird.f32 %v1030
    %v1330 = vadd.s32 %v1313, 3
    %v1331 = vand.u32 %v1330, 3
    %vm1332 = vcmp.lt.s32.totalorder %v1331, 2
    %vm1333 = vcmp.eq.s32.totalorder %v1331, 0
    %v1334 = vxor.u32 %v1328, 2147483648
    %v1335 = vsel %vm1333, %v1320, %v1334
    %vm1336 = vcmp.eq.s32.totalorder %v1331, 2
    %v1337 = vxor.u32 %v1320, 2147483648
    %v1338 = vsel %vm1336, %v1337, %v1328
    %v1339 = vsel %vm1332, %v1335, %v1338
    %v1340 = vsel %vm1329, nan, %v1339
    %v1341 = vstv %s1022
    %v1342 = vmul.f32 %v1341, %v1185
    %v1343 = vmul.f32 %v1341, %v1340
    %v1344 = vadd.f32 %v1020, %v1342
    %v1345 = vadd.f32 %v1021, %v1343
    %1346 = vst [vmem:[#allocation10] sm:$0xff] %v1344
    %1347 = vst [vmem:[#allocation10 + $0x8] sm:$0xff] %v1345
    // Predicated region
    $region10: #{tpu_custom_call.1} parent=1 // pred_check
      _
    $region11: #{tpu_custom_call.1} parent=1 // pred_check_branch
      %1349 = sbr.rel (0) target = $region13
    $region12: #{tpu_custom_call.1} parent=1 // pred_region
      %1351 = vsyncadd [#allocation9], 0
      %s1353 = sshll.u32 [#allocation10], 4
      %s1354 = int_to_ptr.vmem [resolvable:$true] %s1353
      %s1355 = sshll.u32 %s5, 4
      %s1356 = int_to_ptr.hbm [resolvable:$true] %s1355
      %1358 = dma.vmem_to_hbm [thread:$0]  %s1354, 256, %s1356, [#allocation9]
    $region13: #{tpu_custom_call.1} parent=1 // pred_fallthru
      _
    // Predicated region
    $region14: #{tpu_custom_call.1} parent=1 // pred_check
      _
    $region15: #{tpu_custom_call.1} parent=1 // pred_check_branch
      %1360 = sbr.rel (0) target = $region17
    $region16: #{tpu_custom_call.1} parent=1 // pred_region
      %1362 = dma.done [#allocation9], 256
    $region17: #{tpu_custom_call.1} parent=1 // pred_fallthru
      _
    %1363 = vsyncpa [#allocation8], 1
    %1364 = vsyncpa [#allocation9], 1

</llo_original>
